<compile_context>
chip_gen: v7x
topology: tpu7x:2x2x1
jax: 0.10.0
libtpu: 0.0.40
codegen_flags: <defaults>
</compile_context>

<pallas_src>
import math

import jax
import jax.numpy as jnp
from jax.experimental import pallas as pl
from jax.experimental.pallas import tpu as pltpu


# -----------------------------------------------------------------------------
# Generation-aware tiling
# -----------------------------------------------------------------------------
def _tpu_generation():
    try:
        kind = jax.devices()[0].device_kind.lower()
    except Exception:
        kind = ""
    if "v7" in kind or "7x" in kind:
        return "v7x"
    if "v6" in kind:
        return "v6e"
    if "v5" in kind:
        return "v5e"
    return "other"


def _vmem_budget(tb, L, D, feat_itemsize):
    """Rough per-step VMEM working set (double-buffered inputs + f32 temps)."""
    feat = 2 * tb * L * D * feat_itemsize                 # double-buffered feature tiles
    cast = tb * L * D * 2 if feat_itemsize == 4 else 0    # in-kernel bf16 copy of the tile
    work = 4 * tb * L * 128 * 4                           # product p + elementwise temps (f32)
    small = 2 * (D * 128 * 2 + tb * 2 * L * 4 + tb * 128 * 4) + 512
    return feat + cast + work + small


def _select_tile(batch, L, D, feat_itemsize):
    """Pick the batch-tile tb and the scoped-VMEM cap for the current TPU generation."""
    gen = _tpu_generation()
    if gen in ("v7x", "other"):
        # 64 MiB VMEM, 2 TensorCores: smaller tiles, insist on >= 4 parallel grid steps.
        max_tb, min_steps, vmem_cap = 256, 4, 40 << 20
    else:
        # v5e / v6e: 128 MiB physical VMEM (16/32 MiB default scoped -> raised explicitly).
        max_tb, min_steps, vmem_cap = 1024, 2, 100 << 20

    divisors = [t for t in range(8, min(batch, max_tb) + 1, 8)
                if batch % t == 0 and _vmem_budget(t, L, D, feat_itemsize) <= vmem_cap]
    preferred = [t for t in divisors if batch // t >= min_steps]
    if preferred:
        tb = max(preferred)                 # biggest tile that still pipelines / feeds both cores
    elif divisors:
        tb = min(divisors)                  # maximize step count when min_steps is unreachable
    else:
        tb = batch                          # tiny / awkward batch: single whole-batch step
    return tb, vmem_cap


# -----------------------------------------------------------------------------
# Pallas head
# -----------------------------------------------------------------------------
def transformer_time_emb_head(features, mask, mask_final,
                              self_w, self_b, quiry_w, quiry_b, cls_w, cls_b,
                              tb=None):
    """Pallas head for TransformerTimeEmb.

    features   : (B, L, D) f32 or bf16  encoder output (bf16 producer halves HBM traffic)
    mask       : (B, L)    1.0 at valid visits (mask_mult == 1 - mask)
    mask_final : (B, L)    1.0 at the last valid visit
    returns (predictions (B, 2), self_weight (B, L, 1), quiryes (B, H))
    """
    B, L, D = features.shape
    H = quiry_w.shape[1]
    C = cls_w.shape[1]
    OUT_W = 128
    # TODO(synk): the single packed lane slab needs C + H + L <= 128 (i.e. maxlen <= 62);
    #   longer sequences need a second lane slab for self_weight.
    assert C + H + L <= OUT_W, "packed output layout needs C + H + L <= 128"
    assert 1 + H + C <= 128, "fused weight layout needs 1 + H + C <= 128"

    f32 = jnp.float32
    feat_itemsize = jnp.dtype(features.dtype).itemsize

    auto_tb, vmem_cap = _select_tile(B, L, D, feat_itemsize)
    if tb is None:
        tb = auto_tb
    assert B % tb == 0 and (tb % 8 == 0 or tb == B)
    vmem_limit = int(min(max(_vmem_budget(tb, L, D, feat_itemsize) * 3 // 2 + (4 << 20),
                             32 << 20), vmem_cap))

    # --- fused projection weights: lane layout [0]=self | [1:1+H]=quiry | [1+H:1+H+C]=classify
    w_cat = jnp.zeros((D, 128), f32)
    w_cat = w_cat.at[:, 0:1].set(self_w.astype(f32))
    w_cat = w_cat.at[:, 1:1 + H].set(quiry_w.astype(f32))
    w_cat = w_cat.at[:, 1 + H:1 + H + C].set(cls_w.astype(f32))
    w_cat = w_cat.astype(jnp.bfloat16)

    b_cat = jnp.zeros((1, 128), f32)
    # lane 0 (self_layer bias) intentionally left 0: softmax is shift-invariant, so self_b
    # drops out of both self_weight and total_weight (self_b is accepted but unused).
    b_cat = b_cat.at[0, 1:1 + H].set(jnp.asarray(quiry_b, f32).reshape(H))
    b_cat = b_cat.at[0, 1 + H:1 + H + C].set(jnp.asarray(cls_b, f32).reshape(C))

    # Free HBM metadata reshape: (B, L, D) -> (B*L, D), so the kernel never relayouts it.
    features_2d = features.reshape(B * L, D)
    # One merged, lane-packed mask slab -> one small DMA per step instead of two.
    masks_packed = jnp.concatenate([mask.astype(f32), mask_final.astype(f32)], axis=1)  # (B, 2L)

    def kernel(f_ref, m_ref, w_ref, b_ref, o_ref):
        # --- fused projection: one (tb*L, D) @ (D, 128) MXU matmul, f32 accumulation ---
        # bf16 cast happens HERE (post-DMA, in VMEM): no standalone HBM cast pass.
        p = jnp.dot(f_ref[...].astype(jnp.bfloat16), w_ref[...],
                    preferred_element_type=jnp.float32)               # (tb*L, 128)
        p = p.reshape(tb, L, 128)      # free for L=8 (exact f32 sublane tile), 128 lanes

        masks = m_ref[...]                                            # (tb, 2L) f32
        mk = masks[:, :L]                                             # 1 = valid visit
        mf = masks[:, L:2 * L]                                        # 1 = last valid visit
        bias = b_ref[...]                                             # (1, 128) f32

        # --- self-attention logits (lane 0 of p) + masked softmax over visits --------
        # NOTE: finite -1e30 sentinel (not -inf) assumes every patient has >= 1 valid
        # visit (guaranteed by units.pad_matrix_new); an all-padded row would yield
        # uniform weights instead of the reference's NaN.
        logit = jnp.where(mk > 0.5, p[:, :, 0], jnp.float32(-1e30))   # (tb, L)
        m = jnp.max(logit, axis=-1, keepdims=True)
        e = jnp.exp(logit - m)
        s = jnp.sum(e, axis=-1, keepdims=True)
        attn = e / s                                                  # (tb, L) == self_weight
        total = attn / (jnp.sum(attn, axis=-1, keepdims=True) + 1e-5)

        # --- BOTH masked weighted reductions fused into ONE pass over the product ----
        # lanes [1, 1+H) (quiry path) weighted by mask_final; all other lanes (the
        # classify lanes [1+H, 1+H+C) among them) weighted by total_weight.
        lane = jax.lax.broadcasted_iota(jnp.int32, (1, 1, 128), 2)
        use_final = (lane >= 1) & (lane < 1 + H)
        w_comb = jnp.where(use_final, mf[:, :, None], total[:, :, None])   # (tb, L, 128)
        r = jnp.sum(w_comb * p, axis=1)                                    # (tb, 128)
        # r[:, 1:1+H]      == final_statues     @ quiry_w
        # r[:, 1+H:1+H+C]  == averaged_features @ cls_w
        # (masked sums of the bf16-rounded 128-lane product: accumulation order differs
        #  from the torch reference; covered by the bf16-level tolerances below.)

        quiry = jnp.maximum(r[:, 1:1 + H] + bias[:, 1:1 + H], 0.0)         # (tb, H)
        preds = r[:, 1 + H:1 + H + C] + bias[:, 1 + H:1 + H + C]           # (tb, C)

        # --- single lane-dense packed output: [preds | quiryes | self_weight | pad] ---
        parts = [preds, quiry, attn]
        pad_w = OUT_W - (C + H + L)
        if pad_w:
            parts.append(jnp.zeros((tb, pad_w), jnp.float32))
        o_ref[...] = jnp.concatenate(parts, axis=1)

    cost = pl.CostEstimate(
        flops=2 * B * L * D * 128,
        transcendentals=B * L,
        bytes_accessed=B * L * D * feat_itemsize + B * 2 * L * 4
        + D * 128 * 2 + 128 * 4 + B * OUT_W * 4,
    )

    packed = pl.pallas_call(
        kernel,
        out_shape=jax.ShapeDtypeStruct((B, OUT_W), jnp.float32),
        grid_spec=pltpu.PrefetchScalarGridSpec(
            num_scalar_prefetch=0,
            grid=(B // tb,),
            in_specs=[
                # features as a 2-D (tb*L, D) block: no in-kernel relayout copy.
                # (If DMA shows exposed in a trace, add pipeline_mode=pl.Buffered(3) here.)
                pl.BlockSpec((tb * L, D), lambda b: (b, 0)),
                pl.BlockSpec((tb, 2 * L), lambda b: (b, 0)),     # [mask | mask_final]
                pl.BlockSpec((D, 128), lambda b: (0, 0)),        # fused weights (stay resident)
                pl.BlockSpec((1, 128), lambda b: (0, 0)),        # fused biases  (stay resident)
            ],
            out_specs=pl.BlockSpec((tb, OUT_W), lambda b: (b, 0)),
        ),
        compiler_params=pltpu.CompilerParams(
            dimension_semantics=("parallel",),
            vmem_limit_bytes=vmem_limit),
        cost_estimate=cost,
    )(features_2d, masks_packed, w_cat, b_cat)

    preds = packed[:, 0:C]
    quiryes = packed[:, C:C + H]
    self_weight = packed[:, C + H:C + H + L].reshape(B, L, 1)
    return preds, self_weight, quiryes


# -----------------------------------------------------------------------------
# Pure JAX reference for the same post-encoder math (correctness check).
# -----------------------------------------------------------------------------
def reference(features, mask, mask_final, self_w, self_b, quiry_w, quiry_b, cls_w, cls_b):
    mfin = mask_final[..., None]                                          # (B,L,1)
    mmult = (1.0 - mask)[..., None]                                       # (B,L,1)
    final_status = jnp.sum(features * mfin, axis=1, keepdims=True)        # (B,1,D)
    quiryes = jax.nn.relu(final_status @ quiry_w + quiry_b)               # (B,1,H)
    logits = features @ self_w + self_b                                   # (B,L,1)
    logits = jnp.where(mmult > 0.5, -jnp.inf, logits)
    attn = jax.nn.softmax(logits, axis=1)                                 # (B,L,1)
    total = attn / (jnp.sum(attn, axis=1, keepdims=True) + 1e-5)
    avg = jnp.sum(features * total, axis=1)                               # (B,D)
    preds = avg @ cls_w + cls_b                                           # (B,2)
    return preds, attn, quiryes[:, 0]


if __name__ == "__main__":
    B = 16           # batch (16 patients -> tb=8 on v5e/v6e, 2 parallel grid steps)
    L = 8            # maxlen (visits)
    NC = 4           # codes per visit
    VOCAB = 21       # n_diagnosis_codes + 1
    D = 768
    H = 64

    key = jax.random.PRNGKey(0)
    (k_len, k_codes, k_emb, k_sw, k_sb, k_qw,
     k_qb, k_cw, k_cb, k_lab) = jax.random.split(key, 10)

    # ---- synthetic padded batch + masks (units.pad_matrix_new equivalent) ----
    lengths = jax.random.randint(k_len, (B,), 1, L + 1)                        # 1..L valid visits
    diagnosis_codes = jax.random.randint(k_codes, (B, L, NC), 0, VOCAB)
    mask = (jnp.arange(L)[None, :] < lengths[:, None]).astype(jnp.float32)     # (B,L) 1 = valid
    mask_final = (jnp.arange(L)[None, :] == (lengths - 1)[:, None]
                  ).astype(jnp.float32)                                        # (B,L)
    mask_code = jnp.broadcast_to(mask[:, :, None, None], (B, L, NC, 1))        # (B,L,NC,1)

    # ---- feature encoder stand-in  TODO(synk): real EncoderNew transformer not provided ----
    emb = jax.random.normal(k_emb, (VOCAB, D), jnp.float32) * 0.02
    features = jnp.sum(emb[diagnosis_codes] * mask_code, axis=2)               # (B,L,D) f32
    features = features * mask[:, :, None]
    # Features stay f32: the kernel casts to bf16 post-DMA (or accepts bf16 if the encoder
    # emits it directly) — no standalone wrapper-side cast pass over HBM.

    # ---- deterministic Linear parameters (torch Linear init: U(-1/sqrt(in), 1/sqrt(in))) ----
    bound = 1.0 / math.sqrt(D)
    self_w = jax.random.uniform(k_sw, (D, 1), jnp.float32, -bound, bound)
    self_b = jax.random.uniform(k_sb, (1,), jnp.float32, -bound, bound)
    quiry_w = jax.random.uniform(k_qw, (D, H), jnp.float32, -bound, bound)
    quiry_b = jax.random.uniform(k_qb, (H,), jnp.float32, -bound, bound)
    cls_w = jax.random.uniform(k_cw, (D, 2), jnp.float32, -bound, bound)
    cls_b = jax.random.uniform(k_cb, (2,), jnp.float32, -bound, bound)

    head = jax.jit(transformer_time_emb_head)
    preds, self_weight, quiryes = head(features, mask, mask_final,
                                       self_w, self_b, quiry_w, quiry_b, cls_w, cls_b)
    jax.block_until_ready((preds, self_weight, quiryes))

    # labels passthrough (as in the torch forward)
    labels = jax.random.randint(k_lab, (B,), 0, 2)

    # correctness check against pure-JAX f32 reference (kernel feeds the MXU in bf16,
    # so tolerances are set to bf16 precision, not a bug)
    r_preds, r_attn, r_q = reference(features, mask, mask_final,
                                     self_w, self_b, quiry_w, quiry_b, cls_w, cls_b)

    assert preds.shape == (B, 2)
    assert self_weight.shape == (B, L, 1)
    assert quiryes.shape == (B, H)
    assert not bool(jnp.any(jnp.isnan(preds)))
    assert jnp.allclose(preds, r_preds, atol=2e-2, rtol=2e-2)
    assert jnp.allclose(self_weight, r_attn, atol=1e-2, rtol=1e-2)
    assert jnp.allclose(quiryes, r_q, atol=2e-2, rtol=2e-2)

    print("KERNEL_OK")
</pallas_src>

<mosaic_0001>
module attributes {stable_mosaic.version = 11 : i64} {
  func.func @kernel(%arg0: i32, %arg1: memref<64x768xf32, #tpu.memory_space<vmem>>, %arg2: memref<8x16xf32, #tpu.memory_space<vmem>>, %arg3: memref<768x128xbf16, #tpu.memory_space<vmem>>, %arg4: memref<1x128xf32, #tpu.memory_space<vmem>>, %arg5: memref<8x128xf32, #tpu.memory_space<vmem>>) attributes {dimension_semantics = [#tpu.dimension_semantics<parallel>], iteration_bounds = array<i64: 2>, scalar_prefetch = 0 : i64, scratch_operands = 0 : i64, tpu.core_type = #tpu.core_type<tc>, window_params = [{transform_indices = @transform_0, window_bounds = array<i64: 64, 768>}, {transform_indices = @transform_1, window_bounds = array<i64: 8, 16>}, {pipeline_mode = #tpu.pipeline_mode<synchronous>, transform_indices = @transform_2, window_bounds = array<i64: 768, 128>}, {pipeline_mode = #tpu.pipeline_mode<synchronous>, transform_indices = @transform_3, window_bounds = array<i64: 1, 128>}, {transform_indices = @transform_4, window_bounds = array<i64: 8, 128>}]} {
    %c0 = arith.constant 0 : index
    %c0_0 = arith.constant 0 : index
    %0 = vector.load %arg1[%c0, %c0_0] : memref<64x768xf32, #tpu.memory_space<vmem>>, vector<64x768xf32>
    %1 = arith.truncf %0 : vector<64x768xf32> to vector<64x768xbf16>
    %c0_1 = arith.constant 0 : index
    %c0_2 = arith.constant 0 : index
    %2 = vector.load %arg3[%c0_1, %c0_2] : memref<768x128xbf16, #tpu.memory_space<vmem>>, vector<768x128xbf16>
    %cst = arith.constant dense<0.000000e+00> : vector<64x128xf32>
    %3 = tpu.matmul %1, %2, %cst {dimension_numbers = #tpu.dot_dimension_numbers<[1], [0], [0], [1], [0, 0, 1, 1], [], []>} : vector<64x768xbf16>, vector<768x128xbf16>, vector<64x128xf32> -> vector<64x128xf32>
    %4 = vector.shape_cast %3 : vector<64x128xf32> to vector<8x8x128xf32>
    %c0_3 = arith.constant 0 : index
    %c0_4 = arith.constant 0 : index
    %5 = vector.load %arg2[%c0_3, %c0_4] : memref<8x16xf32, #tpu.memory_space<vmem>>, vector<8x16xf32>
    %6 = vector.extract_strided_slice %5 {offsets = [0, 0], sizes = [8, 8], strides = [1, 1]} : vector<8x16xf32> to vector<8x8xf32>
    %7 = vector.extract_strided_slice %5 {offsets = [0, 8], sizes = [8, 8], strides = [1, 1]} : vector<8x16xf32> to vector<8x8xf32>
    %c0_5 = arith.constant 0 : index
    %c0_6 = arith.constant 0 : index
    %8 = vector.load %arg4[%c0_5, %c0_6] : memref<1x128xf32, #tpu.memory_space<vmem>>, vector<1x128xf32>
    %cst_7 = arith.constant 5.000000e-01 : f32
    %9 = vector.broadcast %cst_7 : f32 to vector<8x8xf32>
    %10 = arith.cmpf ogt, %6, %9 : vector<8x8xf32>
    %11 = vector.extract_strided_slice %4 {offsets = [0, 0, 0], sizes = [8, 8, 1], strides = [1, 1, 1]} : vector<8x8x128xf32> to vector<8x8x1xf32>
    %12 = vector.shape_cast %11 : vector<8x8x1xf32> to vector<8x8xf32>
    %cst_8 = arith.constant -1.000000e+30 : f32
    %13 = vector.broadcast %cst_8 : f32 to vector<8x8xf32>
    %14 = arith.select %10, %12, %13 : vector<8x8xi1>, vector<8x8xf32>
    %cst_9 = arith.constant dense<0xFF800000> : vector<8xf32>
    %15 = vector.multi_reduction <maximumf>, %14, %cst_9 [1] : vector<8x8xf32> to vector<8xf32>
    %16 = vector.shape_cast %15 : vector<8xf32> to vector<8x1xf32>
    %17 = vector.broadcast %16 : vector<8x1xf32> to vector<8x8xf32>
    %18 = arith.subf %14, %17 : vector<8x8xf32>
    %19 = math.exp %18 : vector<8x8xf32>
    %cst_10 = arith.constant dense<0.000000e+00> : vector<8xf32>
    %20 = vector.multi_reduction <add>, %19, %cst_10 [1] : vector<8x8xf32> to vector<8xf32>
    %21 = vector.shape_cast %20 : vector<8xf32> to vector<8x1xf32>
    %22 = vector.broadcast %21 : vector<8x1xf32> to vector<8x8xf32>
    %23 = arith.divf %19, %22 : vector<8x8xf32>
    %cst_11 = arith.constant dense<0.000000e+00> : vector<8xf32>
    %24 = vector.multi_reduction <add>, %23, %cst_11 [1] : vector<8x8xf32> to vector<8xf32>
    %25 = vector.shape_cast %24 : vector<8xf32> to vector<8x1xf32>
    %cst_12 = arith.constant 9.99999974E-6 : f32
    %26 = vector.broadcast %cst_12 : f32 to vector<8x1xf32>
    %27 = arith.addf %25, %26 : vector<8x1xf32>
    %28 = vector.broadcast %27 : vector<8x1xf32> to vector<8x8xf32>
    %29 = arith.divf %23, %28 : vector<8x8xf32>
    %30 = tpu.iota {dimensions = array<i32: 2>} : vector<1x1x128xi32>
    %c1_i32 = arith.constant 1 : i32
    %31 = vector.broadcast %c1_i32 : i32 to vector<1x1x128xi32>
    %32 = arith.cmpi sge, %30, %31 : vector<1x1x128xi32>
    %c65_i32 = arith.constant 65 : i32
    %33 = vector.broadcast %c65_i32 : i32 to vector<1x1x128xi32>
    %34 = arith.cmpi slt, %30, %33 : vector<1x1x128xi32>
    %35 = arith.andi %32, %34 : vector<1x1x128xi1>
    %36 = vector.shape_cast %7 : vector<8x8xf32> to vector<8x8x1xf32>
    %37 = vector.shape_cast %29 : vector<8x8xf32> to vector<8x8x1xf32>
    %38 = vector.shape_cast %35 : vector<1x1x128xi1> to vector<1x1x128xi1>
    %39 = vector.broadcast %38 : vector<1x1x128xi1> to vector<8x8x128xi1>
    %40 = vector.shape_cast %36 : vector<8x8x1xf32> to vector<8x8x1xf32>
    %41 = vector.broadcast %40 : vector<8x8x1xf32> to vector<8x8x128xf32>
    %42 = vector.shape_cast %37 : vector<8x8x1xf32> to vector<8x8x1xf32>
    %43 = vector.broadcast %42 : vector<8x8x1xf32> to vector<8x8x128xf32>
    %44 = arith.select %39, %41, %43 : vector<8x8x128xi1>, vector<8x8x128xf32>
    %45 = arith.mulf %44, %4 : vector<8x8x128xf32>
    %cst_13 = arith.constant dense<0.000000e+00> : vector<8x128xf32>
    %46 = vector.multi_reduction <add>, %45, %cst_13 [1] : vector<8x8x128xf32> to vector<8x128xf32>
    %47 = vector.extract_strided_slice %46 {offsets = [0, 1], sizes = [8, 64], strides = [1, 1]} : vector<8x128xf32> to vector<8x64xf32>
    %48 = vector.extract_strided_slice %8 {offsets = [0, 1], sizes = [1, 64], strides = [1, 1]} : vector<1x128xf32> to vector<1x64xf32>
    %49 = vector.broadcast %48 : vector<1x64xf32> to vector<8x64xf32>
    %50 = arith.addf %47, %49 : vector<8x64xf32>
    %cst_14 = arith.constant 0.000000e+00 : f32
    %51 = vector.broadcast %cst_14 : f32 to vector<8x64xf32>
    %52 = arith.maximumf %50, %51 : vector<8x64xf32>
    %53 = vector.extract_strided_slice %46 {offsets = [0, 65], sizes = [8, 2], strides = [1, 1]} : vector<8x128xf32> to vector<8x2xf32>
    %54 = vector.extract_strided_slice %8 {offsets = [0, 65], sizes = [1, 2], strides = [1, 1]} : vector<1x128xf32> to vector<1x2xf32>
    %55 = vector.broadcast %54 : vector<1x2xf32> to vector<8x2xf32>
    %56 = arith.addf %53, %55 : vector<8x2xf32>
    %cst_15 = arith.constant 0.000000e+00 : f32
    %57 = vector.broadcast %cst_15 : f32 to vector<8x54xf32>
    %58 = tpu.concatenate %56, %52, %23, %57 in 1 : vector<8x2xf32>, vector<8x64xf32>, vector<8x8xf32>, vector<8x54xf32> -> vector<8x128xf32>
    %c0_16 = arith.constant 0 : index
    %c0_17 = arith.constant 0 : index
    %59 = vector.load %arg5[%c0_16, %c0_17] : memref<8x128xf32, #tpu.memory_space<vmem>>, vector<8x128xf32>
    tpu.vector_store %arg5[%c0_16, %c0_17], %58 {strides = array<i32>} : memref<8x128xf32, #tpu.memory_space<vmem>>, vector<8x128xf32>,
    return
  }
  func.func @transform_0(%arg0: i32) -> (i32, i32) {
    %c0_i32 = arith.constant 0 : i32
    %c0_i32_0 = arith.constant 0 : i32
    return %arg0, %c0_i32 : i32, i32
  }
  func.func @transform_1(%arg0: i32) -> (i32, i32) {
    %c0_i32 = arith.constant 0 : i32
    %c0_i32_0 = arith.constant 0 : i32
    return %arg0, %c0_i32 : i32, i32
  }
  func.func @transform_2(%arg0: i32) -> (i32, i32) {
    %c0_i32 = arith.constant 0 : i32
    %c0_i32_0 = arith.constant 0 : i32
    %c0_i32_1 = arith.constant 0 : i32
    return %c0_i32, %c0_i32_0 : i32, i32
  }
  func.func @transform_3(%arg0: i32) -> (i32, i32) {
    %c0_i32 = arith.constant 0 : i32
    %c0_i32_0 = arith.constant 0 : i32
    %c0_i32_1 = arith.constant 0 : i32
    return %c0_i32, %c0_i32_0 : i32, i32
  }
  func.func @transform_4(%arg0: i32) -> (i32, i32) {
    %c0_i32 = arith.constant 0 : i32
    %c0_i32_0 = arith.constant 0 : i32
    return %arg0, %c0_i32 : i32, i32
  }
}

</mosaic_0001>

<llo_original>
// kernel: transformer_time_emb_head.1
$region0: #{transformer_time_emb_head.1}
  #allocation0 [shape = 'u32[]', space=smem, size = 0x4, offset = 0x4, fixed_abs, tag = 'smem constant byte address 0x4 - core index']
  #allocation1 [shape = 'u32[144,128]{1,0:T(1,128)}', space=vmem, size = 0x12000, scoped, tag = 'internal scratch']
  %s0 = inlined_call_operand.vmem [shape: f32[128,768], index: 0, kind: input, shape index: {}]
  %s1 = inlined_call_operand.vmem [shape: f32[16,16], index: 1, kind: input, shape index: {}]
  %s2 = inlined_call_operand.vmem [shape: bf16[768,128], index: 2, kind: input, shape index: {}]
  %s3 = inlined_call_operand.vmem [shape: f32[1,128], index: 3, kind: input, shape index: {}]
  %s4 = inlined_call_operand.vmem [shape: f32[16,128], index: 4, kind: output, shape index: {}]
  %s5 = sld [smem:[#allocation0]]
  $region49: #{transformer_time_emb_head.1} parent=0
    _
  %s7 = ssub.s32 1, %s5
  %s8 = scalar_select 0, %s7, %s5
  loop: start=0, step=1, limit=4
  $region2: #{transformer_time_emb_head.1} parent=0 // loop_pre_header
    _
  $region3: #{transformer_time_emb_head.1} parent=0 // loop_header
    %s10 = sphi 0, %s14
    %p11 = scmp.ge.s32.totalorder %s10, 4
    %s20 = sphi 0, %s22
    %s23 = sphi 0, %s20
    %s24 = sphi 0, %s23
    %s40 = sphi 0, %s24
    %s46 = sphi 0, %s48
    %s49 = sphi 0, %s46
    %s50 = sphi 0, %s49
    %s66 = sphi 0, %s50
    %s70 = sphi 0, %s70
    %s72 = sphi 0, %s70
    %s73 = sphi 0, %s72
    %s87 = sphi 0, %s73
    %s91 = sphi 0, %s91
    %s93 = sphi 0, %s91
    %s94 = sphi 0, %s93
    %s108 = sphi 0, %s94
    %s114 = sphi 0, %s116
    %s117 = sphi 0, %s114
    %s118 = sphi 0, %s117
    %s134 = sphi 0, %s118
  $region4: #{transformer_time_emb_head.1} parent=0 // loop_header_branch
    %13 = sbr.rel (%p11) target = $region8
  $region5: #{transformer_time_emb_head.1} parent=0 // loop_body
    %s15 = ssub.s32 %s10, 1
    %s16 = ssub.s32 %s10, 2
    %s17 = sadd.s32 %s10, 1
    %s18 = ssub.s32 %s10, %s17
    %p19 = scmp.eq.s32.totalorder %s18, 0
    %s21 = sadd.s32 %s20, 1
    %s22 = scalar_select %p19, %s20, %s21
    %p25 = pneg %p19
    %p26 = scmp.eq.s32.totalorder %s10, 1
    %p27 = por %p25, %p26
    %p28 = scmp.ne.s32.totalorder %s20, %s23
    %p29 = scmp.eq.s32.totalorder %s10, 0
    %p30 = por %p28, %p29
    %p31 = scmp.ne.s32.totalorder %s20, %s23
    %p32 = scmp.eq.s32.totalorder %s15, 1
    %p33 = por %p31, %p32
    %p34 = scmp.ne.s32.totalorder %s23, %s24
    %p35 = scmp.eq.s32.totalorder %s15, 0
    %p36 = por %p34, %p35
    %p37 = scmp.ne.s32.totalorder %s23, %s24
    %p38 = scmp.eq.s32.totalorder %s16, 1
    %p39 = por %p37, %p38
    %p41 = scmp.ne.s32.totalorder %s24, %s40
    %p42 = scmp.eq.s32.totalorder %s16, 0
    %p43 = por %p41, %p42
    %s44 = ssub.s32 %s10, %s17
    %p45 = scmp.eq.s32.totalorder %s44, 0
    %s47 = sadd.s32 %s46, 1
    %s48 = scalar_select %p45, %s46, %s47
    %p51 = pneg %p45
    %p52 = scmp.eq.s32.totalorder %s10, 1
    %p53 = por %p51, %p52
    %p54 = scmp.ne.s32.totalorder %s46, %s49
    %p55 = scmp.eq.s32.totalorder %s10, 0
    %p56 = por %p54, %p55
    %p57 = scmp.ne.s32.totalorder %s46, %s49
    %p58 = scmp.eq.s32.totalorder %s15, 1
    %p59 = por %p57, %p58
    %p60 = scmp.ne.s32.totalorder %s49, %s50
    %p61 = scmp.eq.s32.totalorder %s15, 0
    %p62 = por %p60, %p61
    %p63 = scmp.ne.s32.totalorder %s49, %s50
    %p64 = scmp.eq.s32.totalorder %s16, 1
    %p65 = por %p63, %p64
    %p67 = scmp.ne.s32.totalorder %s50, %s66
    %p68 = scmp.eq.s32.totalorder %s16, 0
    %p69 = por %p67, %p68
    %s71 = sadd.s32 %s70, 1
    %p74 = scmp.eq.s32.totalorder %s10, 1
    %p75 = scmp.ne.s32.totalorder %s70, %s72
    %p76 = scmp.eq.s32.totalorder %s10, 0
    %p77 = por %p75, %p76
    %p78 = scmp.ne.s32.totalorder %s70, %s72
    %p79 = scmp.eq.s32.totalorder %s15, 1
    %p80 = por %p78, %p79
    %p81 = scmp.ne.s32.totalorder %s72, %s73
    %p82 = scmp.eq.s32.totalorder %s15, 0
    %p83 = por %p81, %p82
    %p84 = scmp.ne.s32.totalorder %s72, %s73
    %p85 = scmp.eq.s32.totalorder %s16, 1
    %p86 = por %p84, %p85
    %p88 = scmp.ne.s32.totalorder %s73, %s87
    %p89 = scmp.eq.s32.totalorder %s16, 0
    %p90 = por %p88, %p89
    %s92 = sadd.s32 %s91, 1
    %p95 = scmp.eq.s32.totalorder %s10, 1
    %p96 = scmp.ne.s32.totalorder %s91, %s93
    %p97 = scmp.eq.s32.totalorder %s10, 0
    %p98 = por %p96, %p97
    %p99 = scmp.ne.s32.totalorder %s91, %s93
    %p100 = scmp.eq.s32.totalorder %s15, 1
    %p101 = por %p99, %p100
    %p102 = scmp.ne.s32.totalorder %s93, %s94
    %p103 = scmp.eq.s32.totalorder %s15, 0
    %p104 = por %p102, %p103
    %p105 = scmp.ne.s32.totalorder %s93, %s94
    %p106 = scmp.eq.s32.totalorder %s16, 1
    %p107 = por %p105, %p106
    %p109 = scmp.ne.s32.totalorder %s94, %s108
    %p110 = scmp.eq.s32.totalorder %s16, 0
    %p111 = por %p109, %p110
    %s112 = ssub.s32 %s10, %s17
    %p113 = scmp.eq.s32.totalorder %s112, 0
    %s115 = sadd.s32 %s114, 1
    %s116 = scalar_select %p113, %s114, %s115
    %p119 = pneg %p113
    %p120 = scmp.eq.s32.totalorder %s10, 1
    %p121 = por %p119, %p120
    %p122 = scmp.ne.s32.totalorder %s114, %s117
    %p123 = scmp.eq.s32.totalorder %s10, 0
    %p124 = por %p122, %p123
    %p125 = scmp.ne.s32.totalorder %s114, %s117
    %p126 = scmp.eq.s32.totalorder %s15, 1
    %p127 = por %p125, %p126
    %p128 = scmp.ne.s32.totalorder %s117, %s118
    %p129 = scmp.eq.s32.totalorder %s15, 0
    %p130 = por %p128, %p129
    %p131 = scmp.ne.s32.totalorder %s117, %s118
    %p132 = scmp.eq.s32.totalorder %s16, 1
    %p133 = por %p131, %p132
    %p135 = scmp.ne.s32.totalorder %s118, %s134
    %p136 = scmp.eq.s32.totalorder %s16, 0
    %p137 = por %p135, %p136
    %p138 = scmp.le.s32.totalorder 1, %s10
    %p139 = scmp.lt.s32.totalorder %s10, 3
    %p140 = pnand %p138, %p139
    %p141 = pneg %p140
    // Predicated region
    $region9: #{transformer_time_emb_head.1} parent=5 // pred_check
      _
    $region10: #{transformer_time_emb_head.1} parent=5 // pred_check_branch
      %143 = sbr.rel (%p140) target = $region12
    $region11: #{transformer_time_emb_head.1} parent=5 // pred_region
      %s144 = ssub.s32 %s10, 1
      // Predicated region
      $region13: #{transformer_time_emb_head.1} parent=11 // pred_check
        %p145 = pneg %p83
      $region14: #{transformer_time_emb_head.1} parent=11 // pred_check_branch
        %147 = sbr.rel (%p145) target = $region16
      $region15: #{transformer_time_emb_head.1} parent=11 // pred_region
        _
      $region16: #{transformer_time_emb_head.1} parent=11 // pred_fallthru
        _
      // Predicated region
      $region17: #{transformer_time_emb_head.1} parent=11 // pred_check
        %p148 = pneg %p104
      $region18: #{transformer_time_emb_head.1} parent=11 // pred_check_branch
        %150 = sbr.rel (%p148) target = $region20
      $region19: #{transformer_time_emb_head.1} parent=11 // pred_region
        _
      $region20: #{transformer_time_emb_head.1} parent=11 // pred_fallthru
        _
    $region12: #{transformer_time_emb_head.1} parent=5 // pred_fallthru
      _
    %p151 = scmp.lt.s32.totalorder %s10, 2
    // Predicated region
    $region21: #{transformer_time_emb_head.1} parent=5 // pred_check
      %p152 = pneg %p151
    $region22: #{transformer_time_emb_head.1} parent=5 // pred_check_branch
      %154 = sbr.rel (%p152) target = $region24
    $region23: #{transformer_time_emb_head.1} parent=5 // pred_region
      // Predicated region
      $region25: #{transformer_time_emb_head.1} parent=23 // pred_check
        %p155 = pneg %p30
      $region26: #{transformer_time_emb_head.1} parent=23 // pred_check_branch
        %157 = sbr.rel (%p155) target = $region28
      $region27: #{transformer_time_emb_head.1} parent=23 // pred_region
        %s158 = smul.u32 8, %s10
        %p159 = scmp.lt.s32.totalorder %s158, 15
        %s160 = scalar_select %p159, %s158, 15
        %s161 = smul.addr %s160, 6
        %s162 = smul.addr %s161, 8
        %s163 = scalar_lea.vmem %s0, %s162
        %s164 = smul.u32 8, %s10
      $region28: #{transformer_time_emb_head.1} parent=23 // pred_fallthru
        _
      // Predicated region
      $region29: #{transformer_time_emb_head.1} parent=23 // pred_check
        %p165 = pneg %p56
      $region30: #{transformer_time_emb_head.1} parent=23 // pred_check_branch
        %167 = sbr.rel (%p165) target = $region32
      $region31: #{transformer_time_emb_head.1} parent=23 // pred_region
        %p168 = scmp.lt.s32.totalorder %s10, 1
        %s169 = scalar_select %p168, %s10, 1
        %s170 = smul.addr %s169, 8
        %s171 = scalar_lea.vmem %s1, %s170
      $region32: #{transformer_time_emb_head.1} parent=23 // pred_fallthru
        _
    $region24: #{transformer_time_emb_head.1} parent=5 // pred_fallthru
      _
    %p172 = scmp.le.s32.totalorder 1, %s10
    %p173 = scmp.lt.s32.totalorder %s10, 3
    %p174 = pnand %p172, %p173
    %p175 = pneg %p174
    // Predicated region
    $region33: #{transformer_time_emb_head.1} parent=5 // pred_check
      _
    $region34: #{transformer_time_emb_head.1} parent=5 // pred_check_branch
      %177 = sbr.rel (%p174) target = $region36
    $region35: #{transformer_time_emb_head.1} parent=5 // pred_region
      %s178 = ssub.s32 %s10, 1
      %s179 = smul.u32 8, %s15
      %p180 = scmp.lt.s32.totalorder %s179, 15
      %s181 = scalar_select %p180, %s179, 15
      %s182 = smul.addr %s181, 6
      %s183 = smul.addr %s182, 8
      %s184 = scalar_lea.vmem %s0, %s183
      %p185 = pneg %p36
      %p186 = pneg %p33
      %p187 = scmp.lt.s32.totalorder %s15, 1
      %s188 = scalar_select %p187, %s15, 1
      %s189 = smul.addr %s188, 8
      %s190 = scalar_lea.vmem %s1, %s189
      %p191 = pneg %p62
      %p192 = pneg %p59
      %p193 = pneg %p83
      %p194 = pneg %p80
      %p195 = pneg %p104
      %p196 = pneg %p101
      %p197 = pneg %p130
      %p198 = pneg %p127
      %p199 = scmp.lt.s32.totalorder %s15, 1
      %s200 = scalar_select %p199, %s15, 1
      %s201 = smul.addr %s200, 8
      %s202 = scalar_lea.vmem %s4, %s201
      %s203 = smul.u32 8, %s15
      %p204 = scmp.lt.s32.totalorder %s203, 15
      %s205 = scalar_select %p204, %s203, 15
      %s206 = smul.addr %s205, 6
      %s207 = smul.addr %s206, 8
      %s208 = scalar_lea.vmem %s0, %s207
      %s209 = smul.u32 8, %s15
      %p210 = scmp.lt.s32.totalorder %s15, 1
      %s211 = scalar_select %p210, %s15, 1
      %s212 = smul.addr %s211, 8
      %s213 = scalar_lea.vmem %s1, %s212
      %p214 = scmp.lt.s32.totalorder %s15, 1
      %s215 = scalar_select %p214, %s15, 1
      %s216 = smul.addr %s215, 8
      %s217 = scalar_lea.vmem %s4, %s216
      %v219 = vld [vmem:[%s208] sm:$0xff]
      %v220 = vld [vmem:[%s208 + $0x8] sm:$0xff]
      %v221 = vld [vmem:[%s208 + $0x10] sm:$0xff]
      %v222 = vld [vmem:[%s208 + $0x18] sm:$0xff]
      %v223 = vld [vmem:[%s208 + $0x20] sm:$0xff]
      %v224 = vld [vmem:[%s208 + $0x28] sm:$0xff]
      %v225 = vld [vmem:[%s208 + $0x30] sm:$0xff]
      %v226 = vld [vmem:[%s208 + $0x38] sm:$0xff]
      %v227 = vld [vmem:[%s208 + $0x40] sm:$0xff]
      %v228 = vld [vmem:[%s208 + $0x48] sm:$0xff]
      %v229 = vld [vmem:[%s208 + $0x50] sm:$0xff]
      %v230 = vld [vmem:[%s208 + $0x58] sm:$0xff]
      %v231 = vld [vmem:[%s208 + $0x60] sm:$0xff]
      %v232 = vld [vmem:[%s208 + $0x68] sm:$0xff]
      %v233 = vld [vmem:[%s208 + $0x70] sm:$0xff]
      %v234 = vld [vmem:[%s208 + $0x78] sm:$0xff]
      %v235 = vld [vmem:[%s208 + $0x80] sm:$0xff]
      %v236 = vld [vmem:[%s208 + $0x88] sm:$0xff]
      %v237 = vld [vmem:[%s208 + $0x90] sm:$0xff]
      %v238 = vld [vmem:[%s208 + $0x98] sm:$0xff]
      %v239 = vld [vmem:[%s208 + $0xa0] sm:$0xff]
      %v240 = vld [vmem:[%s208 + $0xa8] sm:$0xff]
      %v241 = vld [vmem:[%s208 + $0xb0] sm:$0xff]
      %v242 = vld [vmem:[%s208 + $0xb8] sm:$0xff]
      %v243 = vld [vmem:[%s208 + $0xc0] sm:$0xff]
      %v244 = vld [vmem:[%s208 + $0xc8] sm:$0xff]
      %v245 = vld [vmem:[%s208 + $0xd0] sm:$0xff]
      %v246 = vld [vmem:[%s208 + $0xd8] sm:$0xff]
      %v247 = vld [vmem:[%s208 + $0xe0] sm:$0xff]
      %v248 = vld [vmem:[%s208 + $0xe8] sm:$0xff]
      %v249 = vld [vmem:[%s208 + $0xf0] sm:$0xff]
      %v250 = vld [vmem:[%s208 + $0xf8] sm:$0xff]
      %v251 = vld [vmem:[%s208 + $0x100] sm:$0xff]
      %v252 = vld [vmem:[%s208 + $0x108] sm:$0xff]
      %v253 = vld [vmem:[%s208 + $0x110] sm:$0xff]
      %v254 = vld [vmem:[%s208 + $0x118] sm:$0xff]
      %v255 = vld [vmem:[%s208 + $0x120] sm:$0xff]
      %v256 = vld [vmem:[%s208 + $0x128] sm:$0xff]
      %v257 = vld [vmem:[%s208 + $0x130] sm:$0xff]
      %v258 = vld [vmem:[%s208 + $0x138] sm:$0xff]
      %v259 = vld [vmem:[%s208 + $0x140] sm:$0xff]
      %v260 = vld [vmem:[%s208 + $0x148] sm:$0xff]
      %v261 = vld [vmem:[%s208 + $0x150] sm:$0xff]
      %v262 = vld [vmem:[%s208 + $0x158] sm:$0xff]
      %v263 = vld [vmem:[%s208 + $0x160] sm:$0xff]
      %v264 = vld [vmem:[%s208 + $0x168] sm:$0xff]
      %v265 = vld [vmem:[%s208 + $0x170] sm:$0xff]
      %v266 = vld [vmem:[%s208 + $0x178] sm:$0xff]
      %v267 = vpack.c.bf16 %v225, %v219
      %v268 = vpack.c.bf16 %v226, %v220
      %v269 = vpack.c.bf16 %v227, %v221
      %v270 = vpack.c.bf16 %v228, %v222
      %v271 = vpack.c.bf16 %v229, %v223
      %v272 = vpack.c.bf16 %v230, %v224
      %v273 = vpack.c.bf16 %v237, %v231
      %v274 = vpack.c.bf16 %v238, %v232
      %v275 = vpack.c.bf16 %v239, %v233
      %v276 = vpack.c.bf16 %v240, %v234
      %v277 = vpack.c.bf16 %v241, %v235
      %v278 = vpack.c.bf16 %v242, %v236
      %v279 = vpack.c.bf16 %v249, %v243
      %v280 = vpack.c.bf16 %v250, %v244
      %v281 = vpack.c.bf16 %v251, %v245
      %v282 = vpack.c.bf16 %v252, %v246
      %v283 = vpack.c.bf16 %v253, %v247
      %v284 = vpack.c.bf16 %v254, %v248
      %v285 = vpack.c.bf16 %v261, %v255
      %v286 = vpack.c.bf16 %v262, %v256
      %v287 = vpack.c.bf16 %v263, %v257
      %v288 = vpack.c.bf16 %v264, %v258
      %v289 = vpack.c.bf16 %v265, %v259
      %v290 = vpack.c.bf16 %v266, %v260
      %v291 = vld [vmem:[%s2] sm:$0xf]
      %v292 = vld [vmem:[%s2 + $0x4] sm:$0xf]
      %v293 = vld [vmem:[%s2 + $0x8] sm:$0xf]
      %v294 = vld [vmem:[%s2 + $0xc] sm:$0xf]
      %v295 = vld [vmem:[%s2 + $0x10] sm:$0xf]
      %v296 = vld [vmem:[%s2 + $0x14] sm:$0xf]
      %v297 = vld [vmem:[%s2 + $0x18] sm:$0xf]
      %v298 = vld [vmem:[%s2 + $0x1c] sm:$0xf]
      %v299 = vld [vmem:[%s2 + $0x20] sm:$0xf]
      %v300 = vld [vmem:[%s2 + $0x24] sm:$0xf]
      %v301 = vld [vmem:[%s2 + $0x28] sm:$0xf]
      %v302 = vld [vmem:[%s2 + $0x2c] sm:$0xf]
      %v303 = vld [vmem:[%s2 + $0x30] sm:$0xf]
      %v304 = vld [vmem:[%s2 + $0x34] sm:$0xf]
      %v305 = vld [vmem:[%s2 + $0x38] sm:$0xf]
      %v306 = vld [vmem:[%s2 + $0x3c] sm:$0xf]
      %v307 = vld [vmem:[%s2 + $0x40] sm:$0xf]
      %v308 = vld [vmem:[%s2 + $0x44] sm:$0xf]
      %v309 = vld [vmem:[%s2 + $0x48] sm:$0xf]
      %v310 = vld [vmem:[%s2 + $0x4c] sm:$0xf]
      %v311 = vld [vmem:[%s2 + $0x50] sm:$0xf]
      %v312 = vld [vmem:[%s2 + $0x54] sm:$0xf]
      %v313 = vld [vmem:[%s2 + $0x58] sm:$0xf]
      %v314 = vld [vmem:[%s2 + $0x5c] sm:$0xf]
      %v315 = vld [vmem:[%s2 + $0x60] sm:$0xf]
      %v316 = vld [vmem:[%s2 + $0x64] sm:$0xf]
      %v317 = vld [vmem:[%s2 + $0x68] sm:$0xf]
      %v318 = vld [vmem:[%s2 + $0x6c] sm:$0xf]
      %v319 = vld [vmem:[%s2 + $0x70] sm:$0xf]
      %v320 = vld [vmem:[%s2 + $0x74] sm:$0xf]
      %v321 = vld [vmem:[%s2 + $0x78] sm:$0xf]
      %v322 = vld [vmem:[%s2 + $0x7c] sm:$0xf]
      %v323 = vld [vmem:[%s2 + $0x80] sm:$0xf]
      %v324 = vld [vmem:[%s2 + $0x84] sm:$0xf]
      %v325 = vld [vmem:[%s2 + $0x88] sm:$0xf]
      %v326 = vld [vmem:[%s2 + $0x8c] sm:$0xf]
      %v327 = vld [vmem:[%s2 + $0x90] sm:$0xf]
      %v328 = vld [vmem:[%s2 + $0x94] sm:$0xf]
      %v329 = vld [vmem:[%s2 + $0x98] sm:$0xf]
      %v330 = vld [vmem:[%s2 + $0x9c] sm:$0xf]
      %v331 = vld [vmem:[%s2 + $0xa0] sm:$0xf]
      %v332 = vld [vmem:[%s2 + $0xa4] sm:$0xf]
      %v333 = vld [vmem:[%s2 + $0xa8] sm:$0xf]
      %v334 = vld [vmem:[%s2 + $0xac] sm:$0xf]
      %v335 = vld [vmem:[%s2 + $0xb0] sm:$0xf]
      %v336 = vld [vmem:[%s2 + $0xb4] sm:$0xf]
      %v337 = vld [vmem:[%s2 + $0xb8] sm:$0xf]
      %v338 = vld [vmem:[%s2 + $0xbc] sm:$0xf]
      %v339 = vld [vmem:[%s2 + $0xc0] sm:$0xf]
      %v340 = vld [vmem:[%s2 + $0xc4] sm:$0xf]
      %v341 = vld [vmem:[%s2 + $0xc8] sm:$0xf]
      %v342 = vld [vmem:[%s2 + $0xcc] sm:$0xf]
      %v343 = vld [vmem:[%s2 + $0xd0] sm:$0xf]
      %v344 = vld [vmem:[%s2 + $0xd4] sm:$0xf]
      %v345 = vld [vmem:[%s2 + $0xd8] sm:$0xf]
      %v346 = vld [vmem:[%s2 + $0xdc] sm:$0xf]
      %v347 = vld [vmem:[%s2 + $0xe0] sm:$0xf]
      %v348 = vld [vmem:[%s2 + $0xe4] sm:$0xf]
      %v349 = vld [vmem:[%s2 + $0xe8] sm:$0xf]
      %v350 = vld [vmem:[%s2 + $0xec] sm:$0xf]
      %v351 = vld [vmem:[%s2 + $0xf0] sm:$0xf]
      %v352 = vld [vmem:[%s2 + $0xf4] sm:$0xf]
      %v353 = vld [vmem:[%s2 + $0xf8] sm:$0xf]
      %v354 = vld [vmem:[%s2 + $0xfc] sm:$0xf]
      %v355 = vld [vmem:[%s2 + $0x100] sm:$0xf]
      %v356 = vld [vmem:[%s2 + $0x104] sm:$0xf]
      %v357 = vld [vmem:[%s2 + $0x108] sm:$0xf]
      %v358 = vld [vmem:[%s2 + $0x10c] sm:$0xf]
      %v359 = vld [vmem:[%s2 + $0x110] sm:$0xf]
      %v360 = vld [vmem:[%s2 + $0x114] sm:$0xf]
      %v361 = vld [vmem:[%s2 + $0x118] sm:$0xf]
      %v362 = vld [vmem:[%s2 + $0x11c] sm:$0xf]
      %v363 = vld [vmem:[%s2 + $0x120] sm:$0xf]
      %v364 = vld [vmem:[%s2 + $0x124] sm:$0xf]
      %v365 = vld [vmem:[%s2 + $0x128] sm:$0xf]
      %v366 = vld [vmem:[%s2 + $0x12c] sm:$0xf]
      %v367 = vld [vmem:[%s2 + $0x130] sm:$0xf]
      %v368 = vld [vmem:[%s2 + $0x134] sm:$0xf]
      %v369 = vld [vmem:[%s2 + $0x138] sm:$0xf]
      %v370 = vld [vmem:[%s2 + $0x13c] sm:$0xf]
      %v371 = vld [vmem:[%s2 + $0x140] sm:$0xf]
      %v372 = vld [vmem:[%s2 + $0x144] sm:$0xf]
      %v373 = vld [vmem:[%s2 + $0x148] sm:$0xf]
      %v374 = vld [vmem:[%s2 + $0x14c] sm:$0xf]
      %v375 = vld [vmem:[%s2 + $0x150] sm:$0xf]
      %v376 = vld [vmem:[%s2 + $0x154] sm:$0xf]
      %v377 = vld [vmem:[%s2 + $0x158] sm:$0xf]
      %v378 = vld [vmem:[%s2 + $0x15c] sm:$0xf]
      %v379 = vld [vmem:[%s2 + $0x160] sm:$0xf]
      %v380 = vld [vmem:[%s2 + $0x164] sm:$0xf]
      %v381 = vld [vmem:[%s2 + $0x168] sm:$0xf]
      %v382 = vld [vmem:[%s2 + $0x16c] sm:$0xf]
      %v383 = vld [vmem:[%s2 + $0x170] sm:$0xf]
      %v384 = vld [vmem:[%s2 + $0x174] sm:$0xf]
      %v385 = vld [vmem:[%s2 + $0x178] sm:$0xf]
      %v386 = vld [vmem:[%s2 + $0x17c] sm:$0xf]
      %v483 = vunpack.c.l.b16 %v291
      %v484 = vunpack.c.l.b16 %v292
      %v485 = vunpack.c.l.b16 %v293
      %v486 = vunpack.c.l.b16 %v294
      %v487 = vunpack.c.l.b16 %v295
      %v488 = vunpack.c.l.b16 %v296
      %v489 = vunpack.c.l.b16 %v297
      %v490 = vunpack.c.l.b16 %v298
      %v491 = vunpack.c.l.b16 %v299
      %v492 = vunpack.c.l.b16 %v300
      %v493 = vunpack.c.l.b16 %v301
      %v494 = vunpack.c.l.b16 %v302
      %v495 = vunpack.c.l.b16 %v303
      %v496 = vunpack.c.l.b16 %v304
      %v497 = vunpack.c.l.b16 %v305
      %v498 = vunpack.c.l.b16 %v306
      %v499 = vunpack.c.l.b16 %v307
      %v500 = vunpack.c.l.b16 %v308
      %v501 = vunpack.c.l.b16 %v309
      %v502 = vunpack.c.l.b16 %v310
      %v503 = vunpack.c.l.b16 %v311
      %v504 = vunpack.c.l.b16 %v312
      %v505 = vunpack.c.l.b16 %v313
      %v506 = vunpack.c.l.b16 %v314
      %v507 = vunpack.c.l.b16 %v315
      %v508 = vunpack.c.l.b16 %v316
      %v509 = vunpack.c.l.b16 %v317
      %v510 = vunpack.c.l.b16 %v318
      %v511 = vunpack.c.l.b16 %v319
      %v512 = vunpack.c.l.b16 %v320
      %v513 = vunpack.c.l.b16 %v321
      %v514 = vunpack.c.l.b16 %v322
      %v515 = vunpack.c.l.b16 %v323
      %v516 = vunpack.c.l.b16 %v324
      %v517 = vunpack.c.l.b16 %v325
      %v518 = vunpack.c.l.b16 %v326
      %v519 = vunpack.c.l.b16 %v327
      %v520 = vunpack.c.l.b16 %v328
      %v521 = vunpack.c.l.b16 %v329
      %v522 = vunpack.c.l.b16 %v330
      %v523 = vunpack.c.l.b16 %v331
      %v524 = vunpack.c.l.b16 %v332
      %v525 = vunpack.c.l.b16 %v333
      %v526 = vunpack.c.l.b16 %v334
      %v527 = vunpack.c.l.b16 %v335
      %v528 = vunpack.c.l.b16 %v336
      %v529 = vunpack.c.l.b16 %v337
      %v530 = vunpack.c.l.b16 %v338
      %v531 = vunpack.c.l.b16 %v339
      %v532 = vunpack.c.l.b16 %v340
      %v533 = vunpack.c.l.b16 %v341
      %v534 = vunpack.c.l.b16 %v342
      %v535 = vunpack.c.l.b16 %v343
      %v536 = vunpack.c.l.b16 %v344
      %v537 = vunpack.c.l.b16 %v345
      %v538 = vunpack.c.l.b16 %v346
      %v539 = vunpack.c.l.b16 %v347
      %v540 = vunpack.c.l.b16 %v348
      %v541 = vunpack.c.l.b16 %v349
      %v542 = vunpack.c.l.b16 %v350
      %v543 = vunpack.c.l.b16 %v351
      %v544 = vunpack.c.l.b16 %v352
      %v545 = vunpack.c.l.b16 %v353
      %v546 = vunpack.c.l.b16 %v354
      %v547 = vunpack.c.l.b16 %v355
      %v548 = vunpack.c.l.b16 %v356
      %v549 = vunpack.c.l.b16 %v357
      %v550 = vunpack.c.l.b16 %v358
      %v551 = vunpack.c.l.b16 %v359
      %v552 = vunpack.c.l.b16 %v360
      %v553 = vunpack.c.l.b16 %v361
      %v554 = vunpack.c.l.b16 %v362
      %v555 = vunpack.c.l.b16 %v363
      %v556 = vunpack.c.l.b16 %v364
      %v557 = vunpack.c.l.b16 %v365
      %v558 = vunpack.c.l.b16 %v366
      %v559 = vunpack.c.l.b16 %v367
      %v560 = vunpack.c.l.b16 %v368
      %v561 = vunpack.c.l.b16 %v369
      %v562 = vunpack.c.l.b16 %v370
      %v563 = vunpack.c.l.b16 %v371
      %v564 = vunpack.c.l.b16 %v372
      %v565 = vunpack.c.l.b16 %v373
      %v566 = vunpack.c.l.b16 %v374
      %v567 = vunpack.c.l.b16 %v375
      %v568 = vunpack.c.l.b16 %v376
      %v569 = vunpack.c.l.b16 %v377
      %v570 = vunpack.c.l.b16 %v378
      %v571 = vunpack.c.l.b16 %v379
      %v572 = vunpack.c.l.b16 %v380
      %v573 = vunpack.c.l.b16 %v381
      %v574 = vunpack.c.l.b16 %v382
      %v575 = vunpack.c.l.b16 %v383
      %v576 = vunpack.c.l.b16 %v384
      %v577 = vunpack.c.l.b16 %v385
      %v578 = vunpack.c.l.b16 %v386
      %v579 = vpack.c.b16 %v484, %v483
      %v580 = vpack.c.b16 %v486, %v485
      %v581 = vpack.c.b16 %v488, %v487
      %v582 = vpack.c.b16 %v490, %v489
      %v583 = vpack.c.b16 %v492, %v491
      %v584 = vpack.c.b16 %v494, %v493
      %v585 = vpack.c.b16 %v496, %v495
      %v586 = vpack.c.b16 %v498, %v497
      %v587 = vpack.c.b16 %v500, %v499
      %v588 = vpack.c.b16 %v502, %v501
      %v589 = vpack.c.b16 %v504, %v503
      %v590 = vpack.c.b16 %v506, %v505
      %v591 = vpack.c.b16 %v508, %v507
      %v592 = vpack.c.b16 %v510, %v509
      %v593 = vpack.c.b16 %v512, %v511
      %v594 = vpack.c.b16 %v514, %v513
      %v595 = vpack.c.b16 %v516, %v515
      %v596 = vpack.c.b16 %v518, %v517
      %v597 = vpack.c.b16 %v520, %v519
      %v598 = vpack.c.b16 %v522, %v521
      %v599 = vpack.c.b16 %v524, %v523
      %v600 = vpack.c.b16 %v526, %v525
      %v601 = vpack.c.b16 %v528, %v527
      %v602 = vpack.c.b16 %v530, %v529
      %v603 = vpack.c.b16 %v532, %v531
      %v604 = vpack.c.b16 %v534, %v533
      %v605 = vpack.c.b16 %v536, %v535
      %v606 = vpack.c.b16 %v538, %v537
      %v607 = vpack.c.b16 %v540, %v539
      %v608 = vpack.c.b16 %v542, %v541
      %v609 = vpack.c.b16 %v544, %v543
      %v610 = vpack.c.b16 %v546, %v545
      %v611 = vpack.c.b16 %v548, %v547
      %v612 = vpack.c.b16 %v550, %v549
      %v613 = vpack.c.b16 %v552, %v551
      %v614 = vpack.c.b16 %v554, %v553
      %v615 = vpack.c.b16 %v556, %v555
      %v616 = vpack.c.b16 %v558, %v557
      %v617 = vpack.c.b16 %v560, %v559
      %v618 = vpack.c.b16 %v562, %v561
      %v619 = vpack.c.b16 %v564, %v563
      %v620 = vpack.c.b16 %v566, %v565
      %v621 = vpack.c.b16 %v568, %v567
      %v622 = vpack.c.b16 %v570, %v569
      %v623 = vpack.c.b16 %v572, %v571
      %v624 = vpack.c.b16 %v574, %v573
      %v625 = vpack.c.b16 %v576, %v575
      %v626 = vpack.c.b16 %v578, %v577
      %675 = vmatprep.subr.bf16.mxu0 0
      %676 = vmatpush1.bf16.msra.mxu0 %v579
      %677 = vmatprep.subr.bf16.mxu0 0
      %678 = vmatpush1.bf16.msra.mxu0 %v580
      %679 = vmatprep.subr.bf16.mxu0 0
      %680 = vmatpush1.bf16.msra.mxu0 %v581
      %681 = vmatprep.subr.bf16.mxu0 0
      %682 = vmatpush1.bf16.msra.mxu0 %v582
      %683 = vmatprep.subr.bf16.mxu0 0
      %684 = vmatpush1.bf16.msra.mxu0 %v583
      %685 = vmatprep.subr.bf16.mxu0 0
      %686 = vmatpush1.bf16.msra.mxu0 %v584
      %687 = vmatprep.subr.bf16.mxu0 0
      %688 = vmatpush1.bf16.msra.mxu0 %v585
      %689 = vmatprep.subr.bf16.mxu0 0
      %690 = vmatpush1.bf16.msra.mxu0 %v586
      %691 = vmatprep.subr.bf16.mxu0 0
      %692 = vmatpush1.bf16.msra.mxu0 %v587
      %693 = vmatprep.subr.bf16.mxu0 0
      %694 = vmatpush1.bf16.msra.mxu0 %v588
      %695 = vmatprep.subr.bf16.mxu0 0
      %696 = vmatpush1.bf16.msra.mxu0 %v589
      %697 = vmatprep.subr.bf16.mxu0 0
      %698 = vmatpush1.bf16.msra.mxu0 %v590
      %699 = vmatprep.subr.bf16.mxu0 0
      %700 = vmatpush1.bf16.msra.mxu0 %v591
      %701 = vmatprep.subr.bf16.mxu0 0
      %702 = vmatpush1.bf16.msra.mxu0 %v592
      %703 = vmatprep.subr.bf16.mxu0 0
      %704 = vmatpush1.bf16.msra.mxu0 %v593
      %705 = vmatprep.subr.bf16.mxu0 0
      %706 = vmatpush1.bf16.msra.mxu0 %v594
      %707 = vmatprep.mubr.bf16.mxu0 %v268
      %708 = vmatmul.mubr.bf16.gmra.mrb[0].mxu0 %v267
      %v709 = vpop.f32.mrb[0].mxu0
      %v710 = vadd.f32 0.0, %v709
      %v711 = vpop.f32.mrb[0].mxu0
      %v712 = vpop.f32.mrb[0].mxu0
      %v713 = vadd.f32 0.0, %v712
      %v714 = vpop.f32.mrb[0].mxu0
      %715 = vmatprep.mubr.bf16.mxu0 %v274
      %716 = vmatmul.mubr.bf16.gmra.mrb[0].mxu0 %v273
      %v717 = vpop.f32.mrb[0].mxu0
      %v718 = vadd.f32 0.0, %v717
      %v719 = vpop.f32.mrb[0].mxu0
      %v720 = vpop.f32.mrb[0].mxu0
      %v721 = vadd.f32 0.0, %v720
      %v722 = vpop.f32.mrb[0].mxu0
      %723 = vmatprep.mubr.bf16.mxu0 %v280
      %724 = vmatmul.mubr.bf16.gmra.mrb[0].mxu0 %v279
      %v725 = vpop.f32.mrb[0].mxu0
      %v726 = vadd.f32 0.0, %v725
      %v727 = vpop.f32.mrb[0].mxu0
      %v728 = vpop.f32.mrb[0].mxu0
      %v729 = vadd.f32 0.0, %v728
      %v730 = vpop.f32.mrb[0].mxu0
      %731 = vmatprep.mubr.bf16.mxu0 %v286
      %732 = vmatmul.mubr.bf16.gmra.mrb[0].mxu0 %v285
      %v733 = vpop.f32.mrb[0].mxu0
      %v734 = vadd.f32 0.0, %v733
      %v735 = vpop.f32.mrb[0].mxu0
      %v736 = vpop.f32.mrb[0].mxu0
      %v737 = vadd.f32 0.0, %v736
      %v738 = vpop.f32.mrb[0].mxu0
      %739 = vdwg.mxu0
      %740 = vmatprep.subr.bf16.mxu0 0
      %741 = vmatpush1.bf16.msra.mxu0 %v595
      %742 = vmatprep.subr.bf16.mxu0 0
      %743 = vmatpush1.bf16.msra.mxu0 %v596
      %744 = vmatprep.subr.bf16.mxu0 0
      %745 = vmatpush1.bf16.msra.mxu0 %v597
      %746 = vmatprep.subr.bf16.mxu0 0
      %747 = vmatpush1.bf16.msra.mxu0 %v598
      %748 = vmatprep.subr.bf16.mxu0 0
      %749 = vmatpush1.bf16.msra.mxu0 %v599
      %750 = vmatprep.subr.bf16.mxu0 0
      %751 = vmatpush1.bf16.msra.mxu0 %v600
      %752 = vmatprep.subr.bf16.mxu0 0
      %753 = vmatpush1.bf16.msra.mxu0 %v601
      %754 = vmatprep.subr.bf16.mxu0 0
      %755 = vmatpush1.bf16.msra.mxu0 %v602
      %756 = vmatprep.subr.bf16.mxu0 0
      %757 = vmatpush1.bf16.msra.mxu0 %v603
      %758 = vmatprep.subr.bf16.mxu0 0
      %759 = vmatpush1.bf16.msra.mxu0 %v604
      %760 = vmatprep.subr.bf16.mxu0 0
      %761 = vmatpush1.bf16.msra.mxu0 %v605
      %762 = vmatprep.subr.bf16.mxu0 0
      %763 = vmatpush1.bf16.msra.mxu0 %v606
      %764 = vmatprep.subr.bf16.mxu0 0
      %765 = vmatpush1.bf16.msra.mxu0 %v607
      %766 = vmatprep.subr.bf16.mxu0 0
      %767 = vmatpush1.bf16.msra.mxu0 %v608
      %768 = vmatprep.subr.bf16.mxu0 0
      %769 = vmatpush1.bf16.msra.mxu0 %v609
      %770 = vmatprep.subr.bf16.mxu0 0
      %771 = vmatpush1.bf16.msra.mxu0 %v610
      %772 = vmatprep.mubr.bf16.mxu0 %v270
      %773 = vmatmul.mubr.bf16.gmra.mrb[0].mxu0 %v269
      %v774 = vpop.f32.mrb[0].mxu0
      %v775 = vadd.f32 %v710, %v774
      %v776 = vpop.f32.mrb[0].mxu0
      %v777 = vpop.f32.mrb[0].mxu0
      %v778 = vadd.f32 %v713, %v777
      %v779 = vpop.f32.mrb[0].mxu0
      %780 = vmatprep.mubr.bf16.mxu0 %v276
      %781 = vmatmul.mubr.bf16.gmra.mrb[0].mxu0 %v275
      %v782 = vpop.f32.mrb[0].mxu0
      %v783 = vadd.f32 %v718, %v782
      %v784 = vpop.f32.mrb[0].mxu0
      %v785 = vpop.f32.mrb[0].mxu0
      %v786 = vadd.f32 %v721, %v785
      %v787 = vpop.f32.mrb[0].mxu0
      %788 = vmatprep.mubr.bf16.mxu0 %v282
      %789 = vmatmul.mubr.bf16.gmra.mrb[0].mxu0 %v281
      %v790 = vpop.f32.mrb[0].mxu0
      %v791 = vadd.f32 %v726, %v790
      %v792 = vpop.f32.mrb[0].mxu0
      %v793 = vpop.f32.mrb[0].mxu0
      %v794 = vadd.f32 %v729, %v793
      %v795 = vpop.f32.mrb[0].mxu0
      %796 = vmatprep.mubr.bf16.mxu0 %v288
      %797 = vmatmul.mubr.bf16.gmra.mrb[0].mxu0 %v287
      %v798 = vpop.f32.mrb[0].mxu0
      %v799 = vadd.f32 %v734, %v798
      %v800 = vpop.f32.mrb[0].mxu0
      %v801 = vpop.f32.mrb[0].mxu0
      %v802 = vadd.f32 %v737, %v801
      %v803 = vpop.f32.mrb[0].mxu0
      %804 = vdwg.mxu0
      %805 = vmatprep.subr.bf16.mxu0 0
      %806 = vmatpush1.bf16.msra.mxu0 %v611
      %807 = vmatprep.subr.bf16.mxu0 0
      %808 = vmatpush1.bf16.msra.mxu0 %v612
      %809 = vmatprep.subr.bf16.mxu0 0
      %810 = vmatpush1.bf16.msra.mxu0 %v613
      %811 = vmatprep.subr.bf16.mxu0 0
      %812 = vmatpush1.bf16.msra.mxu0 %v614
      %813 = vmatprep.subr.bf16.mxu0 0
      %814 = vmatpush1.bf16.msra.mxu0 %v615
      %815 = vmatprep.subr.bf16.mxu0 0
      %816 = vmatpush1.bf16.msra.mxu0 %v616
      %817 = vmatprep.subr.bf16.mxu0 0
      %818 = vmatpush1.bf16.msra.mxu0 %v617
      %819 = vmatprep.subr.bf16.mxu0 0
      %820 = vmatpush1.bf16.msra.mxu0 %v618
      %821 = vmatprep.subr.bf16.mxu0 0
      %822 = vmatpush1.bf16.msra.mxu0 %v619
      %823 = vmatprep.subr.bf16.mxu0 0
      %824 = vmatpush1.bf16.msra.mxu0 %v620
      %825 = vmatprep.subr.bf16.mxu0 0
      %826 = vmatpush1.bf16.msra.mxu0 %v621
      %827 = vmatprep.subr.bf16.mxu0 0
      %828 = vmatpush1.bf16.msra.mxu0 %v622
      %829 = vmatprep.subr.bf16.mxu0 0
      %830 = vmatpush1.bf16.msra.mxu0 %v623
      %831 = vmatprep.subr.bf16.mxu0 0
      %832 = vmatpush1.bf16.msra.mxu0 %v624
      %833 = vmatprep.subr.bf16.mxu0 0
      %834 = vmatpush1.bf16.msra.mxu0 %v625
      %835 = vmatprep.subr.bf16.mxu0 0
      %836 = vmatpush1.bf16.msra.mxu0 %v626
      %837 = vmatprep.mubr.bf16.mxu0 %v272
      %838 = vmatmul.mubr.bf16.gmra.mrb[0].mxu0 %v271
      %v839 = vpop.f32.mrb[0].mxu0
      %v840 = vadd.f32 %v775, %v839
      %v841 = vpop.f32.mrb[0].mxu0
      %v842 = vpop.f32.mrb[0].mxu0
      %v843 = vadd.f32 %v778, %v842
      %v844 = vpop.f32.mrb[0].mxu0
      %845 = vmatprep.mubr.bf16.mxu0 %v278
      %846 = vmatmul.mubr.bf16.gmra.mrb[0].mxu0 %v277
      %v847 = vpop.f32.mrb[0].mxu0
      %v848 = vadd.f32 %v783, %v847
      %v849 = vpop.f32.mrb[0].mxu0
      %v850 = vpop.f32.mrb[0].mxu0
      %v851 = vadd.f32 %v786, %v850
      %v852 = vpop.f32.mrb[0].mxu0
      %853 = vmatprep.mubr.bf16.mxu0 %v284
      %854 = vmatmul.mubr.bf16.gmra.mrb[0].mxu0 %v283
      %v855 = vpop.f32.mrb[0].mxu0
      %v856 = vadd.f32 %v791, %v855
      %v857 = vpop.f32.mrb[0].mxu0
      %v858 = vpop.f32.mrb[0].mxu0
      %v859 = vadd.f32 %v794, %v858
      %v860 = vpop.f32.mrb[0].mxu0
      %861 = vmatprep.mubr.bf16.mxu0 %v290
      %862 = vmatmul.mubr.bf16.gmra.mrb[0].mxu0 %v289
      %v863 = vpop.f32.mrb[0].mxu0
      %v864 = vadd.f32 %v799, %v863
      %v865 = vpop.f32.mrb[0].mxu0
      %v866 = vpop.f32.mrb[0].mxu0
      %v867 = vadd.f32 %v802, %v866
      %v868 = vpop.f32.mrb[0].mxu0
      %869 = vdwg.mxu0
      %v870 = vld [vmem:[%s213] sm:$0xff]
      %v871 = vld [vmem:[%s3] sm:$0x1]
      %vm872 = vcmp.gt.f32.partialorder %v870, 0.5
      %881 = vset.pattern.permute.xlu0 0
      %882 = vperm.xlu0 %881, %v840
      %v883 = vpop.permute.xlu0 %882
      %884 = vset.pattern.permute.xlu0 0
      %885 = vperm.xlu0 %884, %v843
      %v886 = vpop.permute.xlu0 %885
      %887 = vset.pattern.permute.xlu0 0
      %888 = vperm.xlu0 %887, %v848
      %v889 = vpop.permute.xlu0 %888
      %890 = vset.pattern.permute.xlu0 0
      %891 = vperm.xlu0 %890, %v851
      %v892 = vpop.permute.xlu0 %891
      %893 = vset.pattern.permute.xlu0 0
      %894 = vperm.xlu0 %893, %v856
      %v895 = vpop.permute.xlu0 %894
      %896 = vset.pattern.permute.xlu0 0
      %897 = vperm.xlu0 %896, %v859
      %v898 = vpop.permute.xlu0 %897
      %899 = vset.pattern.permute.xlu0 0
      %900 = vperm.xlu0 %899, %v864
      %v901 = vpop.permute.xlu0 %900
      %902 = vset.pattern.permute.xlu0 0
      %903 = vperm.xlu0 %902, %v867
      %v904 = vpop.permute.xlu0 %903
      %v905 = vlaneseq
      %v906 = vand.u32 %v905, 127
      %v907 = vlaneseq
      %v908 = vshrl.u32 %v907, 7
      %v909 = vsub.s32 %v906, %v908
      %v910 = vrot.slane %v883, %v909
      %v911 = vlaneseq
      %v912 = vshrl.u32 %v911, 7
      %v913 = vsub.s32 %v906, %v912
      %v914 = vrot.slane %v886, %v913
      %v915 = vlaneseq
      %v916 = vshrl.u32 %v915, 7
      %v917 = vsub.s32 %v906, %v916
      %v918 = vrot.slane %v889, %v917
      %v919 = vlaneseq
      %v920 = vshrl.u32 %v919, 7
      %v921 = vsub.s32 %v906, %v920
      %v922 = vrot.slane %v892, %v921
      %v923 = vlaneseq
      %v924 = vshrl.u32 %v923, 7
      %v925 = vsub.s32 %v906, %v924
      %v926 = vrot.slane %v895, %v925
      %v927 = vlaneseq
      %v928 = vshrl.u32 %v927, 7
      %v929 = vsub.s32 %v906, %v928
      %v930 = vrot.slane %v898, %v929
      %v931 = vlaneseq
      %v932 = vshrl.u32 %v931, 7
      %v933 = vsub.s32 %v906, %v932
      %v934 = vrot.slane %v901, %v933
      %v935 = vlaneseq
      %v936 = vshrl.u32 %v935, 7
      %v937 = vsub.s32 %v906, %v936
      %v938 = vrot.slane %v904, %v937
      %vm939 = vcmask 1041409
      %v940 = vsel %vm939, %v914, %v910
      %vm941 = vcmask 1042434
      %v942 = vsel %vm941, %v918, %v940
      %vm943 = vcmask 1043459
      %v944 = vsel %vm943, %v922, %v942
      %vm945 = vcmask 1044484
      %v946 = vsel %vm945, %v926, %v944
      %vm947 = vcmask 1045509
      %v948 = vsel %vm947, %v930, %v946
      %vm949 = vcmask 1046534
      %v950 = vsel %vm949, %v934, %v948
      %vm951 = vcmask 1047559
      %v952 = vsel %vm951, %v938, %v950
      %v954 = vsel %vm872, %v952, -1e+30
      %vm955 = vcmask 64512
      %v956 = vsel %vm955, %v954, -inf
      %957 = vmax.xlane.f32.xlu0 %v956
      %v958 = vpop.xlane.xlu0 %957
      %v959 = vsub.f32 %v954, %v958
      %v960 = vmul.f32 %v959, 1.442695
      %v961 = vpow.pop %v960
      %v962 = vsel %vm955, %v961, 0.0
      %963 = vadd.xlane.f32.xlu0 %v962
      %v964 = vpop.xlane.xlu0 %963
      %v965 = vrcp.pop %v964
      %v966 = vmul.f32 %v961, %v965
      %v967 = vsel %vm955, %v966, 0.0
      %968 = vadd.xlane.f32.xlu0 %v967
      %v969 = vpop.xlane.xlu0 %968
      %v970 = vadd.f32 %v969, 1e-05
      %v971 = vrcp.pop %v970
      %v972 = vmul.f32 %v966, %v971
      %vm973 = vcmp.ge.s32.totalorder %v906, 1
      %vm974 = vcmp.lt.s32.totalorder %v906, 65
      %vm975 = vmand %vm973, %vm974
      %v976 = vlaneseq
      %v977 = vshrl.u32 %v976, 7
      %v978 = vsub.s32 0, %v977
      %v979 = vrot.slane %v870, %v978
      %s981 = sor.u32 256, 8
      %982 = vbcast.lane.b32.xlu0 %v979, %s981
      %v983 = vpop.permute.xlu0 %982
      %v984 = vlaneseq
      %v985 = vshrl.u32 %v984, 7
      %v986 = vsub.s32 1, %v985
      %v987 = vrot.slane %v870, %v986
      %s989 = sor.u32 256, 8
      %990 = vbcast.lane.b32.xlu0 %v987, %s989
      %v991 = vpop.permute.xlu0 %990
      %v992 = vlaneseq
      %v993 = vshrl.u32 %v992, 7
      %v994 = vsub.s32 2, %v993
      %v995 = vrot.slane %v870, %v994
      %s997 = sor.u32 256, 8
      %998 = vbcast.lane.b32.xlu0 %v995, %s997
      %v999 = vpop.permute.xlu0 %998
      %v1000 = vlaneseq
      %v1001 = vshrl.u32 %v1000, 7
      %v1002 = vsub.s32 3, %v1001
      %v1003 = vrot.slane %v870, %v1002
      %s1005 = sor.u32 256, 8
      %1006 = vbcast.lane.b32.xlu0 %v1003, %s1005
      %v1007 = vpop.permute.xlu0 %1006
      %v1008 = vlaneseq
      %v1009 = vshrl.u32 %v1008, 7
      %v1010 = vsub.s32 4, %v1009
      %v1011 = vrot.slane %v870, %v1010
      %s1013 = sor.u32 256, 8
      %1014 = vbcast.lane.b32.xlu0 %v1011, %s1013
      %v1015 = vpop.permute.xlu0 %1014
      %v1016 = vlaneseq
      %v1017 = vshrl.u32 %v1016, 7
      %v1018 = vsub.s32 5, %v1017
      %v1019 = vrot.slane %v870, %v1018
      %s1021 = sor.u32 256, 8
      %1022 = vbcast.lane.b32.xlu0 %v1019, %s1021
      %v1023 = vpop.permute.xlu0 %1022
      %v1024 = vlaneseq
      %v1025 = vshrl.u32 %v1024, 7
      %v1026 = vsub.s32 6, %v1025
      %v1027 = vrot.slane %v870, %v1026
      %s1029 = sor.u32 256, 8
      %1030 = vbcast.lane.b32.xlu0 %v1027, %s1029
      %v1031 = vpop.permute.xlu0 %1030
      %v1032 = vlaneseq
      %v1033 = vshrl.u32 %v1032, 7
      %v1034 = vsub.s32 7, %v1033
      %v1035 = vrot.slane %v870, %v1034
      %s1037 = sor.u32 256, 8
      %1038 = vbcast.lane.b32.xlu0 %v1035, %s1037
      %v1039 = vpop.permute.xlu0 %1038
      %v1040 = vlaneseq
      %v1041 = vshrl.u32 %v1040, 7
      %v1042 = vsub.s32 0, %v1041
      %v1043 = vrot.slane %v972, %v1042
      %1045 = vbcast.lane.b32.xlu0 %v1043, 256
      %v1046 = vpop.permute.xlu0 %1045
      %v1047 = vlaneseq
      %v1048 = vshrl.u32 %v1047, 7
      %v1049 = vsub.s32 1, %v1048
      %v1050 = vrot.slane %v972, %v1049
      %1052 = vbcast.lane.b32.xlu0 %v1050, 256
      %v1053 = vpop.permute.xlu0 %1052
      %v1054 = vlaneseq
      %v1055 = vshrl.u32 %v1054, 7
      %v1056 = vsub.s32 2, %v1055
      %v1057 = vrot.slane %v972, %v1056
      %1059 = vbcast.lane.b32.xlu0 %v1057, 256
      %v1060 = vpop.permute.xlu0 %1059
      %v1061 = vlaneseq
      %v1062 = vshrl.u32 %v1061, 7
      %v1063 = vsub.s32 3, %v1062
      %v1064 = vrot.slane %v972, %v1063
      %1066 = vbcast.lane.b32.xlu0 %v1064, 256
      %v1067 = vpop.permute.xlu0 %1066
      %v1068 = vlaneseq
      %v1069 = vshrl.u32 %v1068, 7
      %v1070 = vsub.s32 4, %v1069
      %v1071 = vrot.slane %v972, %v1070
      %1073 = vbcast.lane.b32.xlu0 %v1071, 256
      %v1074 = vpop.permute.xlu0 %1073
      %v1075 = vlaneseq
      %v1076 = vshrl.u32 %v1075, 7
      %v1077 = vsub.s32 5, %v1076
      %v1078 = vrot.slane %v972, %v1077
      %1080 = vbcast.lane.b32.xlu0 %v1078, 256
      %v1081 = vpop.permute.xlu0 %1080
      %v1082 = vlaneseq
      %v1083 = vshrl.u32 %v1082, 7
      %v1084 = vsub.s32 6, %v1083
      %v1085 = vrot.slane %v972, %v1084
      %1087 = vbcast.lane.b32.xlu0 %v1085, 256
      %v1088 = vpop.permute.xlu0 %1087
      %v1089 = vlaneseq
      %v1090 = vshrl.u32 %v1089, 7
      %v1091 = vsub.s32 7, %v1090
      %v1092 = vrot.slane %v972, %v1091
      %1094 = vbcast.lane.b32.xlu0 %v1092, 256
      %v1095 = vpop.permute.xlu0 %1094
      %v1096 = vsel %vm975, 1, 0
      %vm1097 = vcmp.eq.s32.totalorder %v1096, 1
      %v1098 = vsel %vm1097, %v983, %v1046
      %v1099 = vsel %vm1097, %v991, %v1053
      %v1100 = vsel %vm1097, %v999, %v1060
      %v1101 = vsel %vm1097, %v1007, %v1067
      %v1102 = vsel %vm1097, %v1015, %v1074
      %v1103 = vsel %vm1097, %v1023, %v1081
      %v1104 = vsel %vm1097, %v1031, %v1088
      %v1105 = vsel %vm1097, %v1039, %v1095
      %v1106 = vmul.f32 %v1098, %v840
      %v1107 = vmul.f32 %v1099, %v843
      %v1108 = vmul.f32 %v1100, %v848
      %v1109 = vmul.f32 %v1101, %v851
      %v1110 = vmul.f32 %v1102, %v856
      %v1111 = vmul.f32 %v1103, %v859
      %v1112 = vmul.f32 %v1104, %v864
      %v1113 = vmul.f32 %v1105, %v867
      %v1114 = vrot.slane %v1106, 4
      %v1115 = vadd.f32 %v1106, %v1114
      %v1116 = vrot.slane %v1115, 2
      %v1117 = vadd.f32 %v1115, %v1116
      %v1118 = vrot.slane %v1117, 1
      %v1119 = vadd.f32 %v1117, %v1118
      %v1120 = vrot.slane %v1107, 4
      %v1121 = vadd.f32 %v1107, %v1120
      %v1122 = vrot.slane %v1121, 2
      %v1123 = vadd.f32 %v1121, %v1122
      %v1124 = vrot.slane %v1123, 1
      %v1125 = vadd.f32 %v1123, %v1124
      %v1126 = vrot.slane %v1108, 4
      %v1127 = vadd.f32 %v1108, %v1126
      %v1128 = vrot.slane %v1127, 2
      %v1129 = vadd.f32 %v1127, %v1128
      %v1130 = vrot.slane %v1129, 1
      %v1131 = vadd.f32 %v1129, %v1130
      %v1132 = vrot.slane %v1109, 4
      %v1133 = vadd.f32 %v1109, %v1132
      %v1134 = vrot.slane %v1133, 2
      %v1135 = vadd.f32 %v1133, %v1134
      %v1136 = vrot.slane %v1135, 1
      %v1137 = vadd.f32 %v1135, %v1136
      %v1138 = vrot.slane %v1110, 4
      %v1139 = vadd.f32 %v1110, %v1138
      %v1140 = vrot.slane %v1139, 2
      %v1141 = vadd.f32 %v1139, %v1140
      %v1142 = vrot.slane %v1141, 1
      %v1143 = vadd.f32 %v1141, %v1142
      %v1144 = vrot.slane %v1111, 4
      %v1145 = vadd.f32 %v1111, %v1144
      %v1146 = vrot.slane %v1145, 2
      %v1147 = vadd.f32 %v1145, %v1146
      %v1148 = vrot.slane %v1147, 1
      %v1149 = vadd.f32 %v1147, %v1148
      %v1150 = vrot.slane %v1112, 4
      %v1151 = vadd.f32 %v1112, %v1150
      %v1152 = vrot.slane %v1151, 2
      %v1153 = vadd.f32 %v1151, %v1152
      %v1154 = vrot.slane %v1153, 1
      %v1155 = vadd.f32 %v1153, %v1154
      %v1156 = vrot.slane %v1113, 4
      %v1157 = vadd.f32 %v1113, %v1156
      %v1158 = vrot.slane %v1157, 2
      %v1159 = vadd.f32 %v1157, %v1158
      %v1160 = vrot.slane %v1159, 1
      %v1161 = vadd.f32 %v1159, %v1160
      %v1163 = vlaneseq
      %v1164 = vshrl.u32 %v1163, 7
      %v1165 = vsub.s32 0, %v1164
      %v1166 = vrot.slane %v871, %v1165
      %v1168 = vadd.f32 %v1119, %v1166
      %v1169 = vadd.f32 %v1125, %v1166
      %v1170 = vadd.f32 %v1131, %v1166
      %v1171 = vadd.f32 %v1137, %v1166
      %v1172 = vadd.f32 %v1143, %v1166
      %v1173 = vadd.f32 %v1149, %v1166
      %v1174 = vadd.f32 %v1155, %v1166
      %v1175 = vadd.f32 %v1161, %v1166
      %v1176 = vmax.f32 %v1168, 0.0
      %v1177 = vmax.f32 %v1169, 0.0
      %v1178 = vmax.f32 %v1170, 0.0
      %v1179 = vmax.f32 %v1171, 0.0
      %v1180 = vmax.f32 %v1172, 0.0
      %v1181 = vmax.f32 %v1173, 0.0
      %v1182 = vmax.f32 %v1174, 0.0
      %v1183 = vmax.f32 %v1175, 0.0
      %v1192 = vrot.slane %v1169, 7
      %v1193 = vsel %vm939, %v1192, %v1168
      %v1194 = vrot.slane %v1170, 6
      %v1195 = vsel %vm941, %v1194, %v1193
      %v1196 = vrot.slane %v1171, 5
      %v1197 = vsel %vm943, %v1196, %v1195
      %v1198 = vrot.slane %v1172, 4
      %v1199 = vsel %vm945, %v1198, %v1197
      %v1200 = vrot.slane %v1173, 3
      %v1201 = vsel %vm947, %v1200, %v1199
      %v1202 = vrot.slane %v1174, 2
      %v1203 = vsel %vm949, %v1202, %v1201
      %v1204 = vrot.slane %v1175, 1
      %v1205 = vsel %vm951, %v1204, %v1203
      %1206 = vrot.lane.b32.xlu0 %v1205, 63
      %v1207 = vpop.permute.xlu0 %1206
      %v1217 = vrot.slane %v1177, 7
      %v1218 = vsel %vm939, %v1217, %v1176
      %v1219 = vrot.slane %v1178, 6
      %v1220 = vsel %vm941, %v1219, %v1218
      %v1221 = vrot.slane %v1179, 5
      %v1222 = vsel %vm943, %v1221, %v1220
      %v1223 = vrot.slane %v1180, 4
      %v1224 = vsel %vm945, %v1223, %v1222
      %v1225 = vrot.slane %v1181, 3
      %v1226 = vsel %vm947, %v1225, %v1224
      %v1227 = vrot.slane %v1182, 2
      %v1228 = vsel %vm949, %v1227, %v1226
      %v1229 = vrot.slane %v1183, 1
      %v1230 = vsel %vm951, %v1229, %v1228
      %1231 = vrot.lane.b32.xlu0 %v1230, 1
      %v1232 = vpop.permute.xlu0 %1231
      %1235 = vrot.lane.b32.xlu0 %v966, 66
      %v1236 = vpop.permute.xlu0 %1235
      %vm1238 = vcmask 15360
      %v1239 = vsel %vm1238, %v1207, %v1232
      %vm1240 = vcmask 539648
      %v1241 = vsel %vm1240, %v1239, %v1236
      %vm1242 = vcmask 605184
      %v1243 = vsel %vm1242, %v1241, 0.0
      %1244 = vst [vmem:[%s217] sm:$0xff] %v1243
      %p1245 = scmp.lt.s32.totalorder %s15, 1
      %s1246 = scalar_select %p1245, %s15, 1
      %s1247 = smul.addr %s1246, 8
      %s1248 = scalar_lea.vmem %s4, %s1247
      // Predicated region
      $region37: #{transformer_time_emb_head.1} parent=35 // pred_check
        %p1249 = pneg %p127
      $region38: #{transformer_time_emb_head.1} parent=35 // pred_check_branch
        %1251 = sbr.rel (%p1249) target = $region40
      $region39: #{transformer_time_emb_head.1} parent=35 // pred_region
        _
      $region40: #{transformer_time_emb_head.1} parent=35 // pred_fallthru
        _
    $region36: #{transformer_time_emb_head.1} parent=5 // pred_fallthru
      _
    %p1252 = scmp.le.s32.totalorder 2, %s10
    // Predicated region
    $region41: #{transformer_time_emb_head.1} parent=5 // pred_check
      %p1253 = pneg %p1252
    $region42: #{transformer_time_emb_head.1} parent=5 // pred_check_branch
      %1255 = sbr.rel (%p1253) target = $region44
    $region43: #{transformer_time_emb_head.1} parent=5 // pred_region
      %s1256 = ssub.s32 %s10, 2
      // Predicated region
      $region45: #{transformer_time_emb_head.1} parent=43 // pred_check
        %p1257 = pneg %p133
      $region46: #{transformer_time_emb_head.1} parent=43 // pred_check_branch
        %1259 = sbr.rel (%p1257) target = $region48
      $region47: #{transformer_time_emb_head.1} parent=43 // pred_region
        %p1260 = scmp.lt.s32.totalorder %s16, 1
        %s1261 = scalar_select %p1260, %s16, 1
        %s1262 = smul.addr %s1261, 8
        %s1263 = scalar_lea.vmem %s4, %s1262
      $region48: #{transformer_time_emb_head.1} parent=43 // pred_fallthru
        _
    $region44: #{transformer_time_emb_head.1} parent=5 // pred_fallthru
      _
  $region6: #{transformer_time_emb_head.1} parent=0 // loop_footer
    %s14 = sadd.s32 1, %s10
  $region7: #{transformer_time_emb_head.1} parent=0 // loop_footer_branch
    %9 = sbr.rel target = $region3
  $region8: #{transformer_time_emb_head.1} parent=0 // loop_exit
    _

</llo_original>
